<compile_context>
chip_gen: v7x
topology: tpu7x:2x2x1
jax: 0.10.0
libtpu: 0.0.40
codegen_flags: <defaults>
</compile_context>

<pallas_src>
import jax
import jax.numpy as jnp
from jax.experimental import pallas as pl
from jax.experimental.pallas import tpu as pltpu

_MIB = 1024 * 1024
_SINGLE_PASS_VMEM_BUDGET = 48 * _MIB   # keep headroom under v7x's 64 MiB VMEM
_TWO_PASS_BLOCK_BUDGET = 6 * _MIB      # per x block in the tiled fallback


# ----------------------------------------------------------------------------
# Fused single-pass kernel: one batch's full (C, HW) slab resident in VMEM.
# ----------------------------------------------------------------------------
def _se_fused_kernel(x_ref, w1_ref, b1_ref, w2_ref, b2_ref, o_ref):
    # x: (1, C, HW)   w1: (Cs, C)  b1: (Cs, 1)   w2: (C, Cs)  b2: (C, 1)
    # Global average pool over the lane (HW) axis, accumulated in f32.
    pooled = jnp.mean(x_ref[0].astype(jnp.float32), axis=-1, keepdims=True)  # (C, 1)
    # Squeeze 1x1 conv + bias, then Swish.
    s1 = jnp.dot(w1_ref[...], pooled,
                 preferred_element_type=jnp.float32) + b1_ref[...]           # (Cs, 1)
    s1 = s1 * jax.nn.sigmoid(s1)
    # Excite 1x1 conv + bias, then sigmoid gate.
    s2 = jnp.dot(w2_ref[...], s1,
                 preferred_element_type=jnp.float32) + b2_ref[...]           # (C, 1)
    gate = jax.nn.sigmoid(s2)                                                # (C, 1)
    # Second VMEM read of x (don't keep the big tile live across the MLP);
    # gate broadcasts over the lane axis -> lane-dense store.
    o_ref[0] = (x_ref[0].astype(jnp.float32) * gate).astype(o_ref.dtype)


def _se_single_pass(x_slab, w1, b1, w2, b2, vmem_need):
    B, C, HW = x_slab.shape
    Cs = w1.shape[0]
    vmem_limit = int(min(max(vmem_need + 8 * _MIB, 32 * _MIB), 60 * _MIB))
    return pl.pallas_call(
        _se_fused_kernel,
        out_shape=jax.ShapeDtypeStruct((B, C, HW), x_slab.dtype),
        grid_spec=pltpu.PrefetchScalarGridSpec(
            num_scalar_prefetch=0,
            grid=(B,),
            in_specs=[
                pl.BlockSpec((1, C, HW), lambda b: (b, 0, 0)),
                pl.BlockSpec((Cs, C), lambda b: (0, 0)),
                pl.BlockSpec((Cs, 1), lambda b: (0, 0)),
                pl.BlockSpec((C, Cs), lambda b: (0, 0)),
                pl.BlockSpec((C, 1), lambda b: (0, 0)),
            ],
            out_specs=pl.BlockSpec((1, C, HW), lambda b: (b, 0, 0)),
        ),
        compiler_params=pltpu.CompilerParams(
            dimension_semantics=("parallel",),
            vmem_limit_bytes=vmem_limit,
        ),
    )(x_slab, w1, b1, w2, b2)


# ----------------------------------------------------------------------------
# Two-pass fallback for slabs too large for VMEM: HW-tiled pool+MLP, then
# HW-tiled gating (costs one extra HBM read of x, but bounded VMEM).
# ----------------------------------------------------------------------------
def _make_pool_gate_kernel(total_hw):
    def kernel(x_ref, w1_ref, b1_ref, w2_ref, b2_ref, gate_ref, acc_ref):
        h = pl.program_id(1)

        @pl.when(h == 0)
        def _init():
            acc_ref[...] = jnp.zeros_like(acc_ref)

        hw_tile = x_ref.shape[2]
        xb = x_ref[0].astype(jnp.float32)                          # (C, hw_tile)
        if total_hw % hw_tile != 0:
            # Mask the padded lanes of the (possibly partial) last tile.
            col = jax.lax.broadcasted_iota(jnp.int32, xb.shape, 1) + h * hw_tile
            xb = jnp.where(col < total_hw, xb, 0.0)
        acc_ref[...] += jnp.sum(xb, axis=-1, keepdims=True)        # (C, 1)

        @pl.when(h == pl.num_programs(1) - 1)
        def _finalize():
            pooled = acc_ref[...] * (1.0 / total_hw)
            s1 = jnp.dot(w1_ref[...], pooled,
                         preferred_element_type=jnp.float32) + b1_ref[...]
            s1 = s1 * jax.nn.sigmoid(s1)
            s2 = jnp.dot(w2_ref[...], s1,
                         preferred_element_type=jnp.float32) + b2_ref[...]
            gate_ref[0] = jax.nn.sigmoid(s2)                       # (C, 1)

    return kernel


def _apply_gate_kernel(x_ref, gate_ref, o_ref):
    # x: (1, C, hw_tile)   gate: (1, C, 1) f32
    o_ref[0] = (x_ref[0].astype(jnp.float32) * gate_ref[0]).astype(o_ref.dtype)


def _pick_hw_tile(hw_total, c, itemsize, budget_bytes):
    max_lanes = max(budget_bytes // max(c * itemsize, 1), 128)
    if hw_total <= max_lanes:
        return hw_total
    return max((max_lanes // 128) * 128, 128)


def _se_two_pass(x_slab, w1, b1, w2, b2, *, hw_tile=None):
    B, C, HW = x_slab.shape
    Cs = w1.shape[0]
    itemsize = jnp.dtype(x_slab.dtype).itemsize
    if hw_tile is None:
        hw_tile = _pick_hw_tile(HW, C, itemsize, _TWO_PASS_BLOCK_BUDGET)
    n_hw = pl.cdiv(HW, hw_tile)
    blk_bytes = C * hw_tile * itemsize
    vmem_limit = int(min(max(4 * blk_bytes + 8 * _MIB, 32 * _MIB), 60 * _MIB))

    # Pass 1: HW-tiled pooling + squeeze/excite MLP -> per-(batch, channel) gate.
    gates = pl.pallas_call(
        _make_pool_gate_kernel(HW),
        out_shape=jax.ShapeDtypeStruct((B, C, 1), jnp.float32),
        grid_spec=pltpu.PrefetchScalarGridSpec(
            num_scalar_prefetch=0,
            grid=(B, n_hw),
            in_specs=[
                pl.BlockSpec((1, C, hw_tile), lambda b, h: (b, 0, h)),
                pl.BlockSpec((Cs, C), lambda b, h: (0, 0)),
                pl.BlockSpec((Cs, 1), lambda b, h: (0, 0)),
                pl.BlockSpec((C, Cs), lambda b, h: (0, 0)),
                pl.BlockSpec((C, 1), lambda b, h: (0, 0)),
            ],
            out_specs=pl.BlockSpec((1, C, 1), lambda b, h: (b, 0, 0)),
            scratch_shapes=[pltpu.VMEM((C, 1), jnp.float32)],
        ),
        compiler_params=pltpu.CompilerParams(
            dimension_semantics=("parallel", "arbitrary"),
            vmem_limit_bytes=vmem_limit,
        ),
    )(x_slab, w1, b1, w2, b2)

    # Pass 2: HW-tiled gating; both grid axes parallel (feeds both v7x cores).
    return pl.pallas_call(
        _apply_gate_kernel,
        out_shape=jax.ShapeDtypeStruct((B, C, HW), x_slab.dtype),
        grid_spec=pltpu.PrefetchScalarGridSpec(
            num_scalar_prefetch=0,
            grid=(B, n_hw),
            in_specs=[
                pl.BlockSpec((1, C, hw_tile), lambda b, h: (b, 0, h)),
                pl.BlockSpec((1, C, 1), lambda b, h: (b, 0, 0)),
            ],
            out_specs=pl.BlockSpec((1, C, hw_tile), lambda b, h: (b, 0, h)),
        ),
        compiler_params=pltpu.CompilerParams(
            dimension_semantics=("parallel", "parallel"),
            vmem_limit_bytes=vmem_limit,
        ),
    )(x_slab, gates)


# ----------------------------------------------------------------------------
# Public wrapper (NCHW in / NCHW out, dtype-preserving).
# ----------------------------------------------------------------------------
def se_module_pallas(x_nchw, w1, b1, w2, b2, *, force_two_pass=False, hw_tile=None):
    """x: (B, C, H, W); w1: (Cs, C); b1: (Cs,); w2: (C, Cs); b2: (C,)."""
    B, C, H, W = x_nchw.shape
    Cs = w1.shape[0]
    HW = H * W

    # Free reshape (no data movement): channels on sublanes, HW on lanes.
    x_slab = x_nchw.reshape(B, C, HW)
    w1f = w1.astype(jnp.float32)                 # (Cs, C)
    w2f = w2.astype(jnp.float32)                 # (C, Cs)
    b1c = b1.astype(jnp.float32).reshape(Cs, 1)
    b2c = b2.astype(jnp.float32).reshape(C, 1)

    itemsize = jnp.dtype(x_slab.dtype).itemsize
    slab_bytes = C * HW * itemsize
    # 2x double-buffered input blocks + 2x output blocks + weights/slack.
    single_pass_need = 4 * slab_bytes + 2 * _MIB

    if not force_two_pass and single_pass_need <= _SINGLE_PASS_VMEM_BUDGET:
        out_slab = _se_single_pass(x_slab, w1f, b1c, w2f, b2c, single_pass_need)
    else:
        out_slab = _se_two_pass(x_slab, w1f, b1c, w2f, b2c, hw_tile=hw_tile)

    return out_slab.reshape(B, C, H, W)


def se_module_ref(x, w1, b1, w2, b2):
    """Pure-JAX reference matching the PyTorch module."""
    pooled = jnp.mean(x, axis=(2, 3))                          # (B, C)
    s1 = pooled @ w1.T + b1                                    # (B, Cs)
    s1 = s1 * jax.nn.sigmoid(s1)
    s2 = s1 @ w2.T + b2                                        # (B, C)
    gate = jax.nn.sigmoid(s2)[:, :, None, None]
    return x * gate


if __name__ == "__main__":
    key = jax.random.PRNGKey(0)
    B, C, H, W = 2, 4, 16, 16
    Cs = 2  # squeeze channels

    kx, kw1, kb1, kw2, kb2 = jax.random.split(key, 5)
    x = jax.random.normal(kx, (B, C, H, W), dtype=jnp.float32)
    # Conv2d(in_, squeeze, 1x1) weight: (Cs, C, 1, 1) -> flattened to (Cs, C)
    w1 = jax.random.normal(kw1, (Cs, C), dtype=jnp.float32) * 0.1
    b1 = jax.random.normal(kb1, (Cs,), dtype=jnp.float32) * 0.1
    # Conv2d(squeeze, in_, 1x1) weight: (C, Cs, 1, 1) -> flattened to (C, Cs)
    w2 = jax.random.normal(kw2, (C, Cs), dtype=jnp.float32) * 0.1
    b2 = jax.random.normal(kb2, (C,), dtype=jnp.float32) * 0.1

    ref = se_module_ref(x, w1, b1, w2, b2)

    # 1) Fused single-pass path (the common case).
    out = se_module_pallas(x, w1, b1, w2, b2)
    jax.block_until_ready(out)
    assert out.shape == (B, C, H, W)
    assert jnp.allclose(out, ref, atol=1e-5, rtol=1e-5), "single-pass mismatch"

    # 2) HW-tiled two-pass fallback (used when the per-batch slab exceeds VMEM).
    out2 = se_module_pallas(x, w1, b1, w2, b2, force_two_pass=True, hw_tile=128)
    jax.block_until_ready(out2)
    assert jnp.allclose(out2, ref, atol=1e-5, rtol=1e-5), "two-pass mismatch"

    # 3) Two-pass fallback with a ragged (non-multiple-of-128) spatial extent.
    x3 = jax.random.normal(kx, (B, C, 12, 12), dtype=jnp.float32)
    ref3 = se_module_ref(x3, w1, b1, w2, b2)
    out3 = se_module_pallas(x3, w1, b1, w2, b2, force_two_pass=True, hw_tile=128)
    jax.block_until_ready(out3)
    assert jnp.allclose(out3, ref3, atol=1e-5, rtol=1e-5), "ragged two-pass mismatch"

    # 4) bf16 streaming I/O (halves HBM traffic; internal math stays f32).
    xb16 = x.astype(jnp.bfloat16)
    refb = se_module_ref(xb16.astype(jnp.float32), w1, b1, w2, b2)
    outb = se_module_pallas(xb16, w1, b1, w2, b2)
    jax.block_until_ready(outb)
    assert outb.dtype == jnp.bfloat16
    assert jnp.allclose(outb.astype(jnp.float32), refb, atol=3e-2, rtol=3e-2), \
        "bf16 mismatch"

    print("KERNEL_OK")
</pallas_src>

<mosaic_0001>
module attributes {stable_mosaic.version = 11 : i64} {
  func.func @_se_fused_kernel(%arg0: i32, %arg1: memref<1x4x256xf32, #tpu.memory_space<vmem>>, %arg2: memref<2x4xf32, #tpu.memory_space<vmem>>, %arg3: memref<2x1xf32, #tpu.memory_space<vmem>>, %arg4: memref<4x2xf32, #tpu.memory_space<vmem>>, %arg5: memref<4x1xf32, #tpu.memory_space<vmem>>, %arg6: memref<1x4x256xf32, #tpu.memory_space<vmem>>) attributes {dimension_semantics = [#tpu.dimension_semantics<parallel>], iteration_bounds = array<i64: 2>, scalar_prefetch = 0 : i64, scratch_operands = 0 : i64, tpu.core_type = #tpu.core_type<tc>, window_params = [{transform_indices = @transform_0, window_bounds = array<i64: 1, 4, 256>}, {pipeline_mode = #tpu.pipeline_mode<synchronous>, transform_indices = @transform_1, window_bounds = array<i64: 2, 4>}, {pipeline_mode = #tpu.pipeline_mode<synchronous>, transform_indices = @transform_2, window_bounds = array<i64: 2, 1>}, {pipeline_mode = #tpu.pipeline_mode<synchronous>, transform_indices = @transform_3, window_bounds = array<i64: 4, 2>}, {pipeline_mode = #tpu.pipeline_mode<synchronous>, transform_indices = @transform_4, window_bounds = array<i64: 4, 1>}, {transform_indices = @transform_5, window_bounds = array<i64: 1, 4, 256>}]} {
    %c0 = arith.constant 0 : index
    %c0_0 = arith.constant 0 : index
    %c0_1 = arith.constant 0 : index
    %0 = vector.load %arg1[%c0, %c0_0, %c0_1] : memref<1x4x256xf32, #tpu.memory_space<vmem>>, vector<1x4x256xf32>
    %1 = vector.shape_cast %0 : vector<1x4x256xf32> to vector<4x256xf32>
    %cst = arith.constant dense<0.000000e+00> : vector<4xf32>
    %2 = vector.multi_reduction <add>, %1, %cst [1] : vector<4x256xf32> to vector<4xf32>
    %3 = vector.shape_cast %2 : vector<4xf32> to vector<4x1xf32>
    %cst_2 = arith.constant 2.560000e+02 : f32
    %4 = vector.broadcast %cst_2 : f32 to vector<4x1xf32>
    %5 = arith.divf %3, %4 : vector<4x1xf32>
    %c0_3 = arith.constant 0 : index
    %c0_4 = arith.constant 0 : index
    %6 = vector.load %arg2[%c0_3, %c0_4] : memref<2x4xf32, #tpu.memory_space<vmem>>, vector<2x4xf32>
    %cst_5 = arith.constant dense<0.000000e+00> : vector<2x1xf32>
    %7 = tpu.matmul %6, %5, %cst_5 {dimension_numbers = #tpu.dot_dimension_numbers<[1], [0], [0], [1], [0, 0, 1, 1], [], []>} : vector<2x4xf32>, vector<4x1xf32>, vector<2x1xf32> -> vector<2x1xf32>
    %c0_6 = arith.constant 0 : index
    %c0_7 = arith.constant 0 : index
    %8 = vector.load %arg3[%c0_6, %c0_7] : memref<2x1xf32, #tpu.memory_space<vmem>>, vector<2x1xf32>
    %9 = arith.addf %7, %8 : vector<2x1xf32>
    %10 = arith.negf %9 : vector<2x1xf32>
    %11 = math.exp %10 : vector<2x1xf32>
    %cst_8 = arith.constant 1.000000e+00 : f32
    %12 = vector.broadcast %cst_8 : f32 to vector<2x1xf32>
    %13 = arith.addf %12, %11 : vector<2x1xf32>
    %14 = arith.divf %12, %13 : vector<2x1xf32>
    %15 = arith.mulf %9, %14 : vector<2x1xf32>
    %c0_9 = arith.constant 0 : index
    %c0_10 = arith.constant 0 : index
    %16 = vector.load %arg4[%c0_9, %c0_10] : memref<4x2xf32, #tpu.memory_space<vmem>>, vector<4x2xf32>
    %cst_11 = arith.constant dense<0.000000e+00> : vector<4x1xf32>
    %17 = tpu.matmul %16, %15, %cst_11 {dimension_numbers = #tpu.dot_dimension_numbers<[1], [0], [0], [1], [0, 0, 1, 1], [], []>} : vector<4x2xf32>, vector<2x1xf32>, vector<4x1xf32> -> vector<4x1xf32>
    %c0_12 = arith.constant 0 : index
    %c0_13 = arith.constant 0 : index
    %18 = vector.load %arg5[%c0_12, %c0_13] : memref<4x1xf32, #tpu.memory_space<vmem>>, vector<4x1xf32>
    %19 = arith.addf %17, %18 : vector<4x1xf32>
    %20 = arith.negf %19 : vector<4x1xf32>
    %21 = math.exp %20 : vector<4x1xf32>
    %cst_14 = arith.constant 1.000000e+00 : f32
    %22 = vector.broadcast %cst_14 : f32 to vector<4x1xf32>
    %23 = arith.addf %22, %21 : vector<4x1xf32>
    %24 = arith.divf %22, %23 : vector<4x1xf32>
    %c0_15 = arith.constant 0 : index
    %c0_16 = arith.constant 0 : index
    %c0_17 = arith.constant 0 : index
    %25 = vector.load %arg1[%c0_15, %c0_16, %c0_17] : memref<1x4x256xf32, #tpu.memory_space<vmem>>, vector<1x4x256xf32>
    %26 = vector.shape_cast %25 : vector<1x4x256xf32> to vector<4x256xf32>
    %27 = vector.broadcast %24 : vector<4x1xf32> to vector<4x256xf32>
    %28 = arith.mulf %26, %27 : vector<4x256xf32>
    %c0_18 = arith.constant 0 : index
    %c0_19 = arith.constant 0 : index
    %c0_20 = arith.constant 0 : index
    %29 = vector.load %arg6[%c0_18, %c0_19, %c0_20] : memref<1x4x256xf32, #tpu.memory_space<vmem>>, vector<1x4x256xf32>
    %30 = vector.shape_cast %29 : vector<1x4x256xf32> to vector<4x256xf32>
    %31 = vector.shape_cast %28 : vector<4x256xf32> to vector<1x4x256xf32>
    tpu.vector_store %arg6[%c0_18, %c0_19, %c0_20], %31 {strides = array<i32>} : memref<1x4x256xf32, #tpu.memory_space<vmem>>, vector<1x4x256xf32>,
    return
  }
  func.func @transform_0(%arg0: i32) -> (i32, i32, i32) {
    %c0_i32 = arith.constant 0 : i32
    %c0_i32_0 = arith.constant 0 : i32
    %c0_i32_1 = arith.constant 0 : i32
    return %arg0, %c0_i32, %c0_i32_0 : i32, i32, i32
  }
  func.func @transform_1(%arg0: i32) -> (i32, i32) {
    %c0_i32 = arith.constant 0 : i32
    %c0_i32_0 = arith.constant 0 : i32
    %c0_i32_1 = arith.constant 0 : i32
    return %c0_i32, %c0_i32_0 : i32, i32
  }
  func.func @transform_2(%arg0: i32) -> (i32, i32) {
    %c0_i32 = arith.constant 0 : i32
    %c0_i32_0 = arith.constant 0 : i32
    %c0_i32_1 = arith.constant 0 : i32
    return %c0_i32, %c0_i32_0 : i32, i32
  }
  func.func @transform_3(%arg0: i32) -> (i32, i32) {
    %c0_i32 = arith.constant 0 : i32
    %c0_i32_0 = arith.constant 0 : i32
    %c0_i32_1 = arith.constant 0 : i32
    return %c0_i32, %c0_i32_0 : i32, i32
  }
  func.func @transform_4(%arg0: i32) -> (i32, i32) {
    %c0_i32 = arith.constant 0 : i32
    %c0_i32_0 = arith.constant 0 : i32
    %c0_i32_1 = arith.constant 0 : i32
    return %c0_i32, %c0_i32_0 : i32, i32
  }
  func.func @transform_5(%arg0: i32) -> (i32, i32, i32) {
    %c0_i32 = arith.constant 0 : i32
    %c0_i32_0 = arith.constant 0 : i32
    %c0_i32_1 = arith.constant 0 : i32
    return %arg0, %c0_i32, %c0_i32_0 : i32, i32, i32
  }
}

</mosaic_0001>

<llo_original>
// kernel: tpu_custom_call.1
$region0: #{tpu_custom_call.1}
  #allocation0 [shape = 'u32[]', space=smem, size = 0x4, offset = 0x4, fixed_abs, tag = 'smem constant byte address 0x4 - core index']
  #allocation1 [shape = 'u32[144,128]{1,0:T(1,128)}', space=vmem, size = 0x12000, scoped, tag = 'internal scratch']
  %s0 = inlined_call_operand.hbm [shape: f32[2,4,256], index: 0, kind: input, shape index: {}]
  %s1 = inlined_call_operand.vmem [shape: f32[2,4], index: 1, kind: input, shape index: {}]
  %s2 = inlined_call_operand.vmem [shape: f32[2,1], index: 2, kind: input, shape index: {}]
  %s3 = inlined_call_operand.vmem [shape: f32[4,2], index: 3, kind: input, shape index: {}]
  %s4 = inlined_call_operand.vmem [shape: f32[4,1], index: 4, kind: input, shape index: {}]
  %s5 = inlined_call_operand.hbm [shape: f32[2,4,256], index: 5, kind: output, shape index: {}]
  %s6 = sld [smem:[#allocation0]]
  $region57: #{tpu_custom_call.1} parent=0
    _
  %s8 = ssub.s32 1, %s6
  %s9 = scalar_select 0, %s8, %s6
  $region1: #{tpu_custom_call.1} parent=0
    #allocation2 [shape = 'u8[8192]{0}', space=vmem, size = 0x2000, scoped, tag = 'input window, operand 0']
    #allocation3 [shape = 's32[2]{0}', space=sflag, size = 0x8, scoped, tag = 'scoped memory for tpu_custom_call.1']
    #allocation4 [shape = 's32[2]{0}', space=sflag, size = 0x8, scoped, tag = 'scoped memory for tpu_custom_call.1']
    #allocation5 [shape = 'u8[8192]{0}', space=vmem, size = 0x2000, scoped, tag = 'output window, operand 0']
    %10 = vsyncpa [#allocation3], 0
    %s11 = scalar_lea.sflag [#allocation3], 1
    %12 = vsyncpa %s11, 0
    %13 = vsyncpa [#allocation4], 0
    %s14 = scalar_lea.sflag [#allocation4], 1
    %15 = vsyncpa %s14, 0
    loop: start=0, step=1, limit=4
    $region2: #{tpu_custom_call.1} parent=1 // loop_pre_header
      _
    $region3: #{tpu_custom_call.1} parent=1 // loop_header
      %s17 = sphi 0, %s21
      %p18 = scmp.ge.s32.totalorder %s17, 4
      %s27 = sphi 0, %s29
      %s30 = sphi 0, %s27
      %s31 = sphi 0, %s30
      %s47 = sphi 0, %s31
      %s51 = sphi 0, %s51
      %s53 = sphi 0, %s51
      %s54 = sphi 0, %s53
      %s68 = sphi 0, %s54
      %s72 = sphi 0, %s72
      %s74 = sphi 0, %s72
      %s75 = sphi 0, %s74
      %s89 = sphi 0, %s75
      %s93 = sphi 0, %s93
      %s95 = sphi 0, %s93
      %s96 = sphi 0, %s95
      %s110 = sphi 0, %s96
      %s114 = sphi 0, %s114
      %s116 = sphi 0, %s114
      %s117 = sphi 0, %s116
      %s131 = sphi 0, %s117
      %s137 = sphi 0, %s139
      %s140 = sphi 0, %s137
      %s141 = sphi 0, %s140
      %s157 = sphi 0, %s141
    $region4: #{tpu_custom_call.1} parent=1 // loop_header_branch
      %20 = sbr.rel (%p18) target = $region8
    $region5: #{tpu_custom_call.1} parent=1 // loop_body
      %s22 = ssub.s32 %s17, 1
      %s23 = ssub.s32 %s17, 2
      %s24 = sadd.s32 %s17, 1
      %s25 = ssub.s32 %s17, %s24
      %p26 = scmp.eq.s32.totalorder %s25, 0
      %s28 = sadd.s32 %s27, 1
      %s29 = scalar_select %p26, %s27, %s28
      %p32 = pneg %p26
      %p33 = scmp.eq.s32.totalorder %s17, 1
      %p34 = por %p32, %p33
      %p35 = scmp.ne.s32.totalorder %s27, %s30
      %p36 = scmp.eq.s32.totalorder %s17, 0
      %p37 = por %p35, %p36
      %p38 = scmp.ne.s32.totalorder %s27, %s30
      %p39 = scmp.eq.s32.totalorder %s22, 1
      %p40 = por %p38, %p39
      %p41 = scmp.ne.s32.totalorder %s30, %s31
      %p42 = scmp.eq.s32.totalorder %s22, 0
      %p43 = por %p41, %p42
      %p44 = scmp.ne.s32.totalorder %s30, %s31
      %p45 = scmp.eq.s32.totalorder %s23, 1
      %p46 = por %p44, %p45
      %p48 = scmp.ne.s32.totalorder %s31, %s47
      %p49 = scmp.eq.s32.totalorder %s23, 0
      %p50 = por %p48, %p49
      %s52 = sadd.s32 %s51, 1
      %p55 = scmp.eq.s32.totalorder %s17, 1
      %p56 = scmp.ne.s32.totalorder %s51, %s53
      %p57 = scmp.eq.s32.totalorder %s17, 0
      %p58 = por %p56, %p57
      %p59 = scmp.ne.s32.totalorder %s51, %s53
      %p60 = scmp.eq.s32.totalorder %s22, 1
      %p61 = por %p59, %p60
      %p62 = scmp.ne.s32.totalorder %s53, %s54
      %p63 = scmp.eq.s32.totalorder %s22, 0
      %p64 = por %p62, %p63
      %p65 = scmp.ne.s32.totalorder %s53, %s54
      %p66 = scmp.eq.s32.totalorder %s23, 1
      %p67 = por %p65, %p66
      %p69 = scmp.ne.s32.totalorder %s54, %s68
      %p70 = scmp.eq.s32.totalorder %s23, 0
      %p71 = por %p69, %p70
      %s73 = sadd.s32 %s72, 1
      %p76 = scmp.eq.s32.totalorder %s17, 1
      %p77 = scmp.ne.s32.totalorder %s72, %s74
      %p78 = scmp.eq.s32.totalorder %s17, 0
      %p79 = por %p77, %p78
      %p80 = scmp.ne.s32.totalorder %s72, %s74
      %p81 = scmp.eq.s32.totalorder %s22, 1
      %p82 = por %p80, %p81
      %p83 = scmp.ne.s32.totalorder %s74, %s75
      %p84 = scmp.eq.s32.totalorder %s22, 0
      %p85 = por %p83, %p84
      %p86 = scmp.ne.s32.totalorder %s74, %s75
      %p87 = scmp.eq.s32.totalorder %s23, 1
      %p88 = por %p86, %p87
      %p90 = scmp.ne.s32.totalorder %s75, %s89
      %p91 = scmp.eq.s32.totalorder %s23, 0
      %p92 = por %p90, %p91
      %s94 = sadd.s32 %s93, 1
      %p97 = scmp.eq.s32.totalorder %s17, 1
      %p98 = scmp.ne.s32.totalorder %s93, %s95
      %p99 = scmp.eq.s32.totalorder %s17, 0
      %p100 = por %p98, %p99
      %p101 = scmp.ne.s32.totalorder %s93, %s95
      %p102 = scmp.eq.s32.totalorder %s22, 1
      %p103 = por %p101, %p102
      %p104 = scmp.ne.s32.totalorder %s95, %s96
      %p105 = scmp.eq.s32.totalorder %s22, 0
      %p106 = por %p104, %p105
      %p107 = scmp.ne.s32.totalorder %s95, %s96
      %p108 = scmp.eq.s32.totalorder %s23, 1
      %p109 = por %p107, %p108
      %p111 = scmp.ne.s32.totalorder %s96, %s110
      %p112 = scmp.eq.s32.totalorder %s23, 0
      %p113 = por %p111, %p112
      %s115 = sadd.s32 %s114, 1
      %p118 = scmp.eq.s32.totalorder %s17, 1
      %p119 = scmp.ne.s32.totalorder %s114, %s116
      %p120 = scmp.eq.s32.totalorder %s17, 0
      %p121 = por %p119, %p120
      %p122 = scmp.ne.s32.totalorder %s114, %s116
      %p123 = scmp.eq.s32.totalorder %s22, 1
      %p124 = por %p122, %p123
      %p125 = scmp.ne.s32.totalorder %s116, %s117
      %p126 = scmp.eq.s32.totalorder %s22, 0
      %p127 = por %p125, %p126
      %p128 = scmp.ne.s32.totalorder %s116, %s117
      %p129 = scmp.eq.s32.totalorder %s23, 1
      %p130 = por %p128, %p129
      %p132 = scmp.ne.s32.totalorder %s117, %s131
      %p133 = scmp.eq.s32.totalorder %s23, 0
      %p134 = por %p132, %p133
      %s135 = ssub.s32 %s17, %s24
      %p136 = scmp.eq.s32.totalorder %s135, 0
      %s138 = sadd.s32 %s137, 1
      %s139 = scalar_select %p136, %s137, %s138
      %p142 = pneg %p136
      %p143 = scmp.eq.s32.totalorder %s17, 1
      %p144 = por %p142, %p143
      %p145 = scmp.ne.s32.totalorder %s137, %s140
      %p146 = scmp.eq.s32.totalorder %s17, 0
      %p147 = por %p145, %p146
      %p148 = scmp.ne.s32.totalorder %s137, %s140
      %p149 = scmp.eq.s32.totalorder %s22, 1
      %p150 = por %p148, %p149
      %p151 = scmp.ne.s32.totalorder %s140, %s141
      %p152 = scmp.eq.s32.totalorder %s22, 0
      %p153 = por %p151, %p152
      %p154 = scmp.ne.s32.totalorder %s140, %s141
      %p155 = scmp.eq.s32.totalorder %s23, 1
      %p156 = por %p154, %p155
      %p158 = scmp.ne.s32.totalorder %s141, %s157
      %p159 = scmp.eq.s32.totalorder %s23, 0
      %p160 = por %p158, %p159
      %p161 = scmp.le.s32.totalorder 1, %s17
      %p162 = scmp.lt.s32.totalorder %s17, 3
      %p163 = pnand %p161, %p162
      %p164 = pneg %p163
      // Predicated region
      $region9: #{tpu_custom_call.1} parent=5 // pred_check
        _
      $region10: #{tpu_custom_call.1} parent=5 // pred_check_branch
        %166 = sbr.rel (%p163) target = $region12
      $region11: #{tpu_custom_call.1} parent=5 // pred_region
        %s167 = ssub.s32 %s17, 1
        // Predicated region
        $region13: #{tpu_custom_call.1} parent=11 // pred_check
          %p168 = pneg %p64
        $region14: #{tpu_custom_call.1} parent=11 // pred_check_branch
          %170 = sbr.rel (%p168) target = $region16
        $region15: #{tpu_custom_call.1} parent=11 // pred_region
          _
        $region16: #{tpu_custom_call.1} parent=11 // pred_fallthru
          _
        // Predicated region
        $region17: #{tpu_custom_call.1} parent=11 // pred_check
          %p171 = pneg %p85
        $region18: #{tpu_custom_call.1} parent=11 // pred_check_branch
          %173 = sbr.rel (%p171) target = $region20
        $region19: #{tpu_custom_call.1} parent=11 // pred_region
          _
        $region20: #{tpu_custom_call.1} parent=11 // pred_fallthru
          _
        // Predicated region
        $region21: #{tpu_custom_call.1} parent=11 // pred_check
          %p174 = pneg %p106
        $region22: #{tpu_custom_call.1} parent=11 // pred_check_branch
          %176 = sbr.rel (%p174) target = $region24
        $region23: #{tpu_custom_call.1} parent=11 // pred_region
          _
        $region24: #{tpu_custom_call.1} parent=11 // pred_fallthru
          _
        // Predicated region
        $region25: #{tpu_custom_call.1} parent=11 // pred_check
          %p177 = pneg %p127
        $region26: #{tpu_custom_call.1} parent=11 // pred_check_branch
          %179 = sbr.rel (%p177) target = $region28
        $region27: #{tpu_custom_call.1} parent=11 // pred_region
          _
        $region28: #{tpu_custom_call.1} parent=11 // pred_fallthru
          _
      $region12: #{tpu_custom_call.1} parent=5 // pred_fallthru
        _
      %p180 = scmp.lt.s32.totalorder %s17, 2
      // Predicated region
      $region29: #{tpu_custom_call.1} parent=5 // pred_check
        %p181 = pneg %p180
      $region30: #{tpu_custom_call.1} parent=5 // pred_check_branch
        %183 = sbr.rel (%p181) target = $region32
      $region31: #{tpu_custom_call.1} parent=5 // pred_region
        // Predicated region
        $region33: #{tpu_custom_call.1} parent=31 // pred_check
          %p184 = pneg %p37
        $region34: #{tpu_custom_call.1} parent=31 // pred_check_branch
          %186 = sbr.rel (%p184) target = $region36
        $region35: #{tpu_custom_call.1} parent=31 // pred_region
          %s187 = sand.u32 %s27, 1
          %s188 = scalar_lea.sflag [#allocation3], %s187
          %s189 = sand.u32 %s27, 1
          %s190 = smul.addr %s189, 8
          %s191 = scalar_lea.vmem [#allocation2], %s190
          %s193 = ssub.s32 128, 128
          %194 = vsyncadd %s188, %s193
          %s195 = smul.addr %s17, 2
          %s196 = smul.addr %s195, 64
          %s197 = scalar_lea.hbm %s0, %s196
          %s199 = sshll.u32 %s191, 4
          %s200 = int_to_ptr.vmem [resolvable:$true] %s199
          %202 = dma.hbm_to_vmem [thread:$0]  %s197, 128, %s200, %s188
        $region36: #{tpu_custom_call.1} parent=31 // pred_fallthru
          _
      $region32: #{tpu_custom_call.1} parent=5 // pred_fallthru
        _
      %p203 = scmp.le.s32.totalorder 1, %s17
      %p204 = scmp.lt.s32.totalorder %s17, 3
      %p205 = pnand %p203, %p204
      %p206 = pneg %p205
      // Predicated region
      $region37: #{tpu_custom_call.1} parent=5 // pred_check
        _
      $region38: #{tpu_custom_call.1} parent=5 // pred_check_branch
        %208 = sbr.rel (%p205) target = $region40
      $region39: #{tpu_custom_call.1} parent=5 // pred_region
        %s209 = ssub.s32 %s17, 1
        %s210 = sand.u32 %s30, 1
        %s211 = scalar_lea.sflag [#allocation3], %s210
        %s212 = sand.u32 %s30, 1
        %s213 = smul.addr %s212, 8
        %s214 = scalar_lea.vmem [#allocation2], %s213
        // Predicated region
        $region41: #{tpu_custom_call.1} parent=39 // pred_check
          %p215 = pneg %p43
        $region42: #{tpu_custom_call.1} parent=39 // pred_check_branch
          %217 = sbr.rel (%p215) target = $region44
        $region43: #{tpu_custom_call.1} parent=39 // pred_region
          %218 = dma.done %s211, 128
        $region44: #{tpu_custom_call.1} parent=39 // pred_fallthru
          _
        %s219 = sand.u32 %s30, 1
        %s220 = scalar_lea.sflag [#allocation3], %s219
        %s221 = sand.u32 %s30, 1
        %s222 = smul.addr %s221, 8
        %s223 = scalar_lea.vmem [#allocation2], %s222
        %p224 = pneg %p43
        %p225 = pneg %p40
        %p226 = pneg %p64
        %p227 = pneg %p61
        %p228 = pneg %p85
        %p229 = pneg %p82
        %p230 = pneg %p106
        %p231 = pneg %p103
        %p232 = pneg %p127
        %p233 = pneg %p124
        %p234 = pneg %p153
        %p235 = pneg %p150
        %s236 = sand.u32 %s140, 1
        %s237 = scalar_lea.sflag [#allocation4], %s236
        %s238 = sand.u32 %s140, 1
        %s239 = smul.addr %s238, 8
        %s240 = scalar_lea.vmem [#allocation5], %s239
        %v241 = vld [vmem:[%s214] sm:$0xff]
        %v243 = vcombine.high %v241, %v241
        %vm245 = vcmask 1043456
        %v246 = vsel %vm245, %v241, 0.0
        %v247 = vsel %vm245, %v243, 0.0
        %v248 = vadd.f32 %v246, %v247
        %249 = vadd.xlane.f32.xlu0 %v248
        %v250 = vpop.xlane.xlu0 %249
        %v251 = vrcp.pop 256.0
        %v252 = vmul.f32 %v250, %v251
        %v253 = vld [vmem:[%s1] sm:$0x3]
        %v254 = vld [vmem:[%s2] sm:$0x3]
        %vm255 = vcmask 31744
        %v257 = vsel %vm255, %v253, 0
        %v260 = vsel %vm245, %v252, 0
        %262 = vmatprep.subr.mxu0 0.0
        %263 = vmatpush1.msra.mxu0 %v260
        %264 = vmatprep.subr.mxu0 0.0
        %265 = vmatpush1.msra.mxu0 0.0
        %266 = vmatprep.subr.mxu0 0.0
        %267 = vmatpush1.msra.mxu0 0.0
        %268 = vmatprep.subr.mxu0 0.0
        %269 = vmatpush1.msra.mxu0 0.0
        %270 = vmatprep.subr.mxu0 0.0
        %271 = vmatpush1.msra.mxu0 0.0
        %272 = vmatprep.subr.mxu0 0.0
        %273 = vmatpush1.msra.mxu0 0.0
        %274 = vmatprep.subr.mxu0 0.0
        %275 = vmatpush1.msra.mxu0 0.0
        %276 = vmatprep.subr.mxu0 0.0
        %277 = vmatpush1.msra.mxu0 0.0
        %278 = vmatprep.subr.mxu0 0.0
        %279 = vmatpush1.msra.mxu0 0.0
        %280 = vmatprep.subr.mxu0 0.0
        %281 = vmatpush1.msra.mxu0 0.0
        %282 = vmatprep.subr.mxu0 0.0
        %283 = vmatpush1.msra.mxu0 0.0
        %284 = vmatprep.subr.mxu0 0.0
        %285 = vmatpush1.msra.mxu0 0.0
        %286 = vmatprep.subr.mxu0 0.0
        %287 = vmatpush1.msra.mxu0 0.0
        %288 = vmatprep.subr.mxu0 0.0
        %289 = vmatpush1.msra.mxu0 0.0
        %290 = vmatprep.subr.mxu0 0.0
        %291 = vmatpush1.msra.mxu0 0.0
        %292 = vmatprep.subr.mxu0 0.0
        %293 = vmatpush1.msra.mxu0 0.0
        %294 = vmatprep.subr.mxu0 0.0
        %295 = vmatpush1.msra.mxu0 0.0
        %296 = vmatprep.subr.mxu0 0.0
        %297 = vmatpush1.msra.mxu0 0.0
        %298 = vmatprep.subr.mxu0 0.0
        %299 = vmatpush1.msra.mxu0 0.0
        %300 = vmatprep.subr.mxu0 0.0
        %301 = vmatpush1.msra.mxu0 0.0
        %302 = vmatprep.subr.mxu0 0.0
        %303 = vmatpush1.msra.mxu0 0.0
        %304 = vmatprep.subr.mxu0 0.0
        %305 = vmatpush1.msra.mxu0 0.0
        %306 = vmatprep.subr.mxu0 0.0
        %307 = vmatpush1.msra.mxu0 0.0
        %308 = vmatprep.subr.mxu0 0.0
        %309 = vmatpush1.msra.mxu0 0.0
        %310 = vmatprep.subr.mxu0 0.0
        %311 = vmatpush1.msra.mxu0 0.0
        %312 = vmatprep.subr.mxu0 0.0
        %313 = vmatpush1.msra.mxu0 0.0
        %314 = vmatprep.subr.mxu0 0.0
        %315 = vmatpush1.msra.mxu0 0.0
        %316 = vmatprep.subr.mxu0 0.0
        %317 = vmatpush1.msra.mxu0 0.0
        %318 = vmatprep.subr.mxu0 0.0
        %319 = vmatpush1.msra.mxu0 0.0
        %320 = vmatprep.subr.mxu0 0.0
        %321 = vmatpush1.msra.mxu0 0.0
        %322 = vmatprep.subr.mxu0 0.0
        %323 = vmatpush1.msra.mxu0 0.0
        %324 = vmatprep.subr.mxu0 0.0
        %325 = vmatpush1.msra.mxu0 0.0
        %326 = vmatprep.mubr.f32.mxu0 0.0
        %327 = vmatmul.mubr.f32.gmra.mrb[0].mxu0 %v257
        %v328 = vpop.f32.mrb[0].mxu0
        %v329 = vadd.f32 %v254, %v328
        %v330 = vpop.f32.mrb[0].mxu0
        %331 = vdwg.mxu0
        %v332 = vxor.u32 %v329, 2147483648
        %v333 = vmul.f32 %v332, 1.442695
        %v334 = vpow.pop %v333
        %v335 = vadd.f32 %v334, 1.0
        %v336 = vrcp.pop %v335
        %v337 = vmul.f32 1.0, %v336
        %v338 = vmul.f32 %v329, %v337
        %v339 = vld [vmem:[%s3] sm:$0xf]
        %v340 = vld [vmem:[%s4] sm:$0xf]
        %vm341 = vcmask 15360
        %v343 = vsel %vm341, %v339, 0
        %vm345 = vcmask 1041408
        %v347 = vsel %vm345, %v338, 0
        %349 = vmatprep.subr.mxu0 0.0
        %350 = vmatpush1.msra.mxu0 %v347
        %351 = vmatprep.subr.mxu0 0.0
        %352 = vmatpush1.msra.mxu0 0.0
        %353 = vmatprep.subr.mxu0 0.0
        %354 = vmatpush1.msra.mxu0 0.0
        %355 = vmatprep.subr.mxu0 0.0
        %356 = vmatpush1.msra.mxu0 0.0
        %357 = vmatprep.subr.mxu0 0.0
        %358 = vmatpush1.msra.mxu0 0.0
        %359 = vmatprep.subr.mxu0 0.0
        %360 = vmatpush1.msra.mxu0 0.0
        %361 = vmatprep.subr.mxu0 0.0
        %362 = vmatpush1.msra.mxu0 0.0
        %363 = vmatprep.subr.mxu0 0.0
        %364 = vmatpush1.msra.mxu0 0.0
        %365 = vmatprep.subr.mxu0 0.0
        %366 = vmatpush1.msra.mxu0 0.0
        %367 = vmatprep.subr.mxu0 0.0
        %368 = vmatpush1.msra.mxu0 0.0
        %369 = vmatprep.subr.mxu0 0.0
        %370 = vmatpush1.msra.mxu0 0.0
        %371 = vmatprep.subr.mxu0 0.0
        %372 = vmatpush1.msra.mxu0 0.0
        %373 = vmatprep.subr.mxu0 0.0
        %374 = vmatpush1.msra.mxu0 0.0
        %375 = vmatprep.subr.mxu0 0.0
        %376 = vmatpush1.msra.mxu0 0.0
        %377 = vmatprep.subr.mxu0 0.0
        %378 = vmatpush1.msra.mxu0 0.0
        %379 = vmatprep.subr.mxu0 0.0
        %380 = vmatpush1.msra.mxu0 0.0
        %381 = vmatprep.subr.mxu0 0.0
        %382 = vmatpush1.msra.mxu0 0.0
        %383 = vmatprep.subr.mxu0 0.0
        %384 = vmatpush1.msra.mxu0 0.0
        %385 = vmatprep.subr.mxu0 0.0
        %386 = vmatpush1.msra.mxu0 0.0
        %387 = vmatprep.subr.mxu0 0.0
        %388 = vmatpush1.msra.mxu0 0.0
        %389 = vmatprep.subr.mxu0 0.0
        %390 = vmatpush1.msra.mxu0 0.0
        %391 = vmatprep.subr.mxu0 0.0
        %392 = vmatpush1.msra.mxu0 0.0
        %393 = vmatprep.subr.mxu0 0.0
        %394 = vmatpush1.msra.mxu0 0.0
        %395 = vmatprep.subr.mxu0 0.0
        %396 = vmatpush1.msra.mxu0 0.0
        %397 = vmatprep.subr.mxu0 0.0
        %398 = vmatpush1.msra.mxu0 0.0
        %399 = vmatprep.subr.mxu0 0.0
        %400 = vmatpush1.msra.mxu0 0.0
        %401 = vmatprep.subr.mxu0 0.0
        %402 = vmatpush1.msra.mxu0 0.0
        %403 = vmatprep.subr.mxu0 0.0
        %404 = vmatpush1.msra.mxu0 0.0
        %405 = vmatprep.subr.mxu0 0.0
        %406 = vmatpush1.msra.mxu0 0.0
        %407 = vmatprep.subr.mxu0 0.0
        %408 = vmatpush1.msra.mxu0 0.0
        %409 = vmatprep.subr.mxu0 0.0
        %410 = vmatpush1.msra.mxu0 0.0
        %411 = vmatprep.subr.mxu0 0.0
        %412 = vmatpush1.msra.mxu0 0.0
        %413 = vmatprep.mubr.f32.mxu0 0.0
        %414 = vmatmul.mubr.f32.gmra.mrb[0].mxu0 %v343
        %v415 = vpop.f32.mrb[0].mxu0
        %v416 = vadd.f32 %v340, %v415
        %v417 = vpop.f32.mrb[0].mxu0
        %418 = vdwg.mxu0
        %v419 = vxor.u32 %v416, 2147483648
        %v420 = vmul.f32 %v419, 1.442695
        %v421 = vpow.pop %v420
        %v422 = vadd.f32 %v421, 1.0
        %v423 = vrcp.pop %v422
        %v424 = vmul.f32 1.0, %v423
        %426 = vset.pattern.permute.xlu0 0
        %427 = vperm.xlu0 %426, %v424
        %v428 = vpop.permute.xlu0 %427
        %v430 = vunpack.c.l.s4 839922192
        %v431 = vunpack.c.0.s8 %v430
        %v432 = vlaneseq
        %v433 = vshrl.u32 %v432, 7
        %v434 = vsub.s32 %v431, %v433
        %v435 = vrot.slane %v428, %v434
        %v437 = vmul.f32 %v241, %v435
        %438 = vst [vmem:[%s240] sm:$0xff] %v437
        %s439 = sand.u32 %s140, 1
        %s440 = scalar_lea.sflag [#allocation4], %s439
        %s441 = sand.u32 %s140, 1
        %s442 = smul.addr %s441, 8
        %s443 = scalar_lea.vmem [#allocation5], %s442
        // Predicated region
        $region45: #{tpu_custom_call.1} parent=39 // pred_check
          %p444 = pneg %p150
        $region46: #{tpu_custom_call.1} parent=39 // pred_check_branch
          %446 = sbr.rel (%p444) target = $region48
        $region47: #{tpu_custom_call.1} parent=39 // pred_region
          %s448 = ssub.s32 128, 128
          %449 = vsyncadd %s440, %s448
          %s450 = smul.addr %s22, 2
          %s451 = smul.addr %s450, 64
          %s452 = scalar_lea.hbm %s5, %s451
          %s454 = sshll.u32 %s443, 4
          %s455 = int_to_ptr.vmem [resolvable:$true] %s454
          %457 = dma.vmem_to_hbm [thread:$0]  %s455, 128, %s452, %s440
        $region48: #{tpu_custom_call.1} parent=39 // pred_fallthru
          _
      $region40: #{tpu_custom_call.1} parent=5 // pred_fallthru
        _
      %p458 = scmp.le.s32.totalorder 2, %s17
      // Predicated region
      $region49: #{tpu_custom_call.1} parent=5 // pred_check
        %p459 = pneg %p458
      $region50: #{tpu_custom_call.1} parent=5 // pred_check_branch
        %461 = sbr.rel (%p459) target = $region52
      $region51: #{tpu_custom_call.1} parent=5 // pred_region
        %s462 = ssub.s32 %s17, 2
        // Predicated region
        $region53: #{tpu_custom_call.1} parent=51 // pred_check
          %p463 = pneg %p156
        $region54: #{tpu_custom_call.1} parent=51 // pred_check_branch
          %465 = sbr.rel (%p463) target = $region56
        $region55: #{tpu_custom_call.1} parent=51 // pred_region
          %s466 = sand.u32 %s141, 1
          %s467 = scalar_lea.sflag [#allocation4], %s466
          %s468 = sand.u32 %s141, 1
          %s469 = smul.addr %s468, 8
          %s470 = scalar_lea.vmem [#allocation5], %s469
          %471 = dma.done %s467, 128
        $region56: #{tpu_custom_call.1} parent=51 // pred_fallthru
          _
      $region52: #{tpu_custom_call.1} parent=5 // pred_fallthru
        _
    $region6: #{tpu_custom_call.1} parent=1 // loop_footer
      %s21 = sadd.s32 1, %s17
    $region7: #{tpu_custom_call.1} parent=1 // loop_footer_branch
      %16 = sbr.rel target = $region3
    $region8: #{tpu_custom_call.1} parent=1 // loop_exit
      _
    %472 = vsyncpa [#allocation3], 1
    %s473 = scalar_lea.sflag [#allocation3], 1
    %474 = vsyncpa %s473, 1
    %475 = vsyncpa [#allocation4], 1
    %s476 = scalar_lea.sflag [#allocation4], 1
    %477 = vsyncpa %s476, 1

</llo_original>
